<compile_context>
chip_gen: v7x
topology: tpu7x:2x2x1
jax: 0.10.0
libtpu: 0.0.40
codegen_flags: <defaults>
</compile_context>

<pallas_src>
import functools
import math

import jax
import jax.numpy as jnp
from jax.experimental import pallas as pl
from jax.experimental.pallas import tpu as pltpu


# ---------------------------------------------------------------------------
# Kernels
# ---------------------------------------------------------------------------

def _mean_last_kernel(x_ref, o_ref, *, inv_r):
    # x_ref: (tile_rows, R) with R on the lane axis -> cross-lane reduce (XLU).
    x = x_ref[...].astype(jnp.float32)
    s = jnp.sum(x, axis=-1, keepdims=True)          # (tile_rows, 1)
    o_ref[...] = (s * inv_r).astype(o_ref.dtype)


def _mean_mid_kernel(x_ref, o_ref, *, inv_r):
    # x_ref: (tile_pre, R, post); trailing `post` stays lane-dense, reduce over
    # the interior axis (sublane reduce) -> no transposes needed anywhere.
    x = x_ref[...].astype(jnp.float32)
    s = jnp.sum(x, axis=1)                          # (tile_pre, post)
    o_ref[...] = (s * inv_r).astype(o_ref.dtype)


# ---------------------------------------------------------------------------
# Wrappers
# ---------------------------------------------------------------------------

_BLOCK_BUDGET_BYTES = 4 << 20   # per input block; Pallas double-buffers it


def _pick_tile(total, bytes_per_unit):
    """Largest tile (multiple of 8) of `total` units fitting the VMEM budget."""
    t = _BLOCK_BUDGET_BYTES // max(1, bytes_per_unit)
    t = max(8, (t // 8) * 8)
    t = min(t, 2048)
    if total <= t:
        return total            # single full-extent block (no divisibility rule)
    return t


def _compiler_params(block_bytes):
    vmem_limit = int(min(32 << 20, 8 * block_bytes + (4 << 20)))
    return pltpu.CompilerParams(
        dimension_semantics=("parallel",),
        vmem_limit_bytes=vmem_limit,
    )


def _mean_reduce_last(x2d):
    """Mean over the last axis of (rows, R)."""
    rows, r = x2d.shape
    itemsize = jnp.dtype(x2d.dtype).itemsize
    tile_rows = _pick_tile(rows, r * itemsize)
    rows_p = pl.cdiv(rows, tile_rows) * tile_rows
    if rows_p != rows:
        x2d = jnp.pad(x2d, ((0, rows_p - rows), (0, 0)))

    out = pl.pallas_call(
        functools.partial(_mean_last_kernel, inv_r=1.0 / r),
        out_shape=jax.ShapeDtypeStruct((rows_p, 1), x2d.dtype),
        grid_spec=pltpu.PrefetchScalarGridSpec(
            num_scalar_prefetch=0,
            grid=(rows_p // tile_rows,),
            in_specs=[pl.BlockSpec((tile_rows, r), lambda i: (i, 0))],
            out_specs=pl.BlockSpec((tile_rows, 1), lambda i: (i, 0)),
        ),
        compiler_params=_compiler_params(tile_rows * r * itemsize),
    )(x2d)
    return out[:rows, 0]


def _mean_reduce_mid(x3d):
    """Mean over the middle axis of (pre, R, post); `post` stays on lanes."""
    pre, r, post = x3d.shape
    itemsize = jnp.dtype(x3d.dtype).itemsize
    tile_pre = _pick_tile(pre, r * post * itemsize)
    pre_p = pl.cdiv(pre, tile_pre) * tile_pre
    if pre_p != pre:
        x3d = jnp.pad(x3d, ((0, pre_p - pre), (0, 0), (0, 0)))

    out = pl.pallas_call(
        functools.partial(_mean_mid_kernel, inv_r=1.0 / r),
        out_shape=jax.ShapeDtypeStruct((pre_p, post), x3d.dtype),
        grid_spec=pltpu.PrefetchScalarGridSpec(
            num_scalar_prefetch=0,
            grid=(pre_p // tile_pre,),
            in_specs=[pl.BlockSpec((tile_pre, r, post), lambda i: (i, 0, 0))],
            out_specs=pl.BlockSpec((tile_pre, post), lambda i: (i, 0)),
        ),
        compiler_params=_compiler_params(tile_pre * r * post * itemsize),
    )(x3d)
    return out[:pre, :]


def mean_pool(x, dim):
    """Pallas equivalent of MeanPool.forward: x.mean(dim=dim)."""
    ndim = x.ndim
    dim = dim % ndim
    shape = x.shape
    r = shape[dim]
    pre = math.prod(shape[:dim])
    post = math.prod(shape[dim + 1:])
    out_shape = shape[:dim] + shape[dim + 1:]

    if post == 1:
        # Reduced axis is (effectively) the trailing one: put it on lanes.
        y = _mean_reduce_last(x.reshape(pre, r))            # (pre,)
    else:
        # Interior axis: keep the trailing axes lane-dense, reduce on sublanes.
        # TODO(synk): for extremely large R*post slabs, additionally tile the
        # `post` axis; not needed at these shapes.
        y = _mean_reduce_mid(x.reshape(pre, r, post))       # (pre, post)
    return y.reshape(out_shape)


# ---------------------------------------------------------------------------
# Demo / self-test
# ---------------------------------------------------------------------------

if __name__ == "__main__":
    key = jax.random.PRNGKey(0)
    B, M, D, N = 2, 4, 16, 16
    x = jax.random.normal(key, (B, M, D, N), dtype=jnp.float32)

    # MeanPool over the trailing (sequence) axis — the typical ModernTCN usage.
    out_last = jax.block_until_ready(mean_pool(x, dim=-1))
    ref_last = jnp.mean(x, axis=-1)
    assert out_last.shape == ref_last.shape
    assert jnp.allclose(out_last, ref_last, atol=1e-5, rtol=1e-5)

    # Also exercise an interior-axis reduction (no transposes, N stays on lanes).
    out_mid = jax.block_until_ready(mean_pool(x, dim=2))
    ref_mid = jnp.mean(x, axis=2)
    assert out_mid.shape == ref_mid.shape
    assert jnp.allclose(out_mid, ref_mid, atol=1e-5, rtol=1e-5)

    print("KERNEL_OK")
</pallas_src>

<mosaic_0001>
module attributes {stable_mosaic.version = 11 : i64} {
  func.func @_mean_last_kernel(%arg0: i32, %arg1: memref<128x16xf32, #tpu.memory_space<vmem>>, %arg2: memref<128x1xf32, #tpu.memory_space<vmem>>) attributes {dimension_semantics = [#tpu.dimension_semantics<parallel>], iteration_bounds = array<i64: 1>, scalar_prefetch = 0 : i64, scratch_operands = 0 : i64, tpu.core_type = #tpu.core_type<tc>, window_params = [{transform_indices = @transform_0, window_bounds = array<i64: 128, 16>}, {transform_indices = @transform_1, window_bounds = array<i64: 128, 1>}]} {
    %c0 = arith.constant 0 : index
    %c0_0 = arith.constant 0 : index
    %0 = vector.load %arg1[%c0, %c0_0] : memref<128x16xf32, #tpu.memory_space<vmem>>, vector<128x16xf32>
    %cst = arith.constant dense<0.000000e+00> : vector<128xf32>
    %1 = vector.multi_reduction <add>, %0, %cst [1] : vector<128x16xf32> to vector<128xf32>
    %2 = vector.shape_cast %1 : vector<128xf32> to vector<128x1xf32>
    %cst_1 = arith.constant 6.250000e-02 : f32
    %3 = vector.broadcast %cst_1 : f32 to vector<128x1xf32>
    %4 = arith.mulf %2, %3 : vector<128x1xf32>
    %c0_2 = arith.constant 0 : index
    %c0_3 = arith.constant 0 : index
    %5 = vector.load %arg2[%c0_2, %c0_3] : memref<128x1xf32, #tpu.memory_space<vmem>>, vector<128x1xf32>
    tpu.vector_store %arg2[%c0_2, %c0_3], %4 {strides = array<i32>} : memref<128x1xf32, #tpu.memory_space<vmem>>, vector<128x1xf32>,
    return
  }
  func.func @transform_0(%arg0: i32) -> (i32, i32) {
    %c0_i32 = arith.constant 0 : i32
    %c0_i32_0 = arith.constant 0 : i32
    return %arg0, %c0_i32 : i32, i32
  }
  func.func @transform_1(%arg0: i32) -> (i32, i32) {
    %c0_i32 = arith.constant 0 : i32
    %c0_i32_0 = arith.constant 0 : i32
    return %arg0, %c0_i32 : i32, i32
  }
}

</mosaic_0001>

<llo_original>
// kernel: tpu_custom_call.1
$region0: #{tpu_custom_call.1}
  #allocation0 [shape = 'u32[]', space=smem, size = 0x4, offset = 0x4, fixed_abs, tag = 'smem constant byte address 0x4 - core index']
  #allocation1 [shape = 'u32[144,128]{1,0:T(1,128)}', space=vmem, size = 0x12000, scoped, tag = 'internal scratch']
  %s0 = inlined_call_operand.vmem [shape: f32[128,16], index: 0, kind: input, shape index: {}]
  %s1 = inlined_call_operand.vmem [shape: f32[128,1], index: 1, kind: output, shape index: {}]
  %s2 = sld [smem:[#allocation0]]
  $region14: #{tpu_custom_call.1} parent=0
    _
  %s4 = ssub.s32 1, %s2
  %s5 = scalar_select 0, %s4, %s2
  // Predicated region
  $region2: #{tpu_custom_call.1} parent=0 // pred_check
    _
  $region3: #{tpu_custom_call.1} parent=0 // pred_check_branch
    %7 = sbr.rel (0) target = $region5
  $region4: #{tpu_custom_call.1} parent=0 // pred_region
    _
  $region5: #{tpu_custom_call.1} parent=0 // pred_fallthru
    _
  %v8 = vld [vmem:[%s0] sm:$0xff]
  %v9 = vld [vmem:[%s0 + $0x8] sm:$0xff]
  %v10 = vld [vmem:[%s0 + $0x10] sm:$0xff]
  %v11 = vld [vmem:[%s0 + $0x18] sm:$0xff]
  %v12 = vld [vmem:[%s0 + $0x20] sm:$0xff]
  %v13 = vld [vmem:[%s0 + $0x28] sm:$0xff]
  %v14 = vld [vmem:[%s0 + $0x30] sm:$0xff]
  %v15 = vld [vmem:[%s0 + $0x38] sm:$0xff]
  %v16 = vld [vmem:[%s0 + $0x40] sm:$0xff]
  %v17 = vld [vmem:[%s0 + $0x48] sm:$0xff]
  %v18 = vld [vmem:[%s0 + $0x50] sm:$0xff]
  %v19 = vld [vmem:[%s0 + $0x58] sm:$0xff]
  %v20 = vld [vmem:[%s0 + $0x60] sm:$0xff]
  %v21 = vld [vmem:[%s0 + $0x68] sm:$0xff]
  %v22 = vld [vmem:[%s0 + $0x70] sm:$0xff]
  %v23 = vld [vmem:[%s0 + $0x78] sm:$0xff]
  %vm24 = vcmask 130048
  %v25 = vsel %vm24, %v8, 0.0
  %26 = vadd.xlane.f32.xlu0 %v25
  %v27 = vpop.xlane.xlu0 %26
  %v28 = vsel %vm24, %v9, 0.0
  %29 = vadd.xlane.f32.xlu0 %v28
  %v30 = vpop.xlane.xlu0 %29
  %v31 = vsel %vm24, %v10, 0.0
  %32 = vadd.xlane.f32.xlu0 %v31
  %v33 = vpop.xlane.xlu0 %32
  %v34 = vsel %vm24, %v11, 0.0
  %35 = vadd.xlane.f32.xlu0 %v34
  %v36 = vpop.xlane.xlu0 %35
  %v37 = vsel %vm24, %v12, 0.0
  %38 = vadd.xlane.f32.xlu0 %v37
  %v39 = vpop.xlane.xlu0 %38
  %v40 = vsel %vm24, %v13, 0.0
  %41 = vadd.xlane.f32.xlu0 %v40
  %v42 = vpop.xlane.xlu0 %41
  %v43 = vsel %vm24, %v14, 0.0
  %44 = vadd.xlane.f32.xlu0 %v43
  %v45 = vpop.xlane.xlu0 %44
  %v46 = vsel %vm24, %v15, 0.0
  %47 = vadd.xlane.f32.xlu0 %v46
  %v48 = vpop.xlane.xlu0 %47
  %v49 = vsel %vm24, %v16, 0.0
  %50 = vadd.xlane.f32.xlu0 %v49
  %v51 = vpop.xlane.xlu0 %50
  %v52 = vsel %vm24, %v17, 0.0
  %53 = vadd.xlane.f32.xlu0 %v52
  %v54 = vpop.xlane.xlu0 %53
  %v55 = vsel %vm24, %v18, 0.0
  %56 = vadd.xlane.f32.xlu0 %v55
  %v57 = vpop.xlane.xlu0 %56
  %v58 = vsel %vm24, %v19, 0.0
  %59 = vadd.xlane.f32.xlu0 %v58
  %v60 = vpop.xlane.xlu0 %59
  %v61 = vsel %vm24, %v20, 0.0
  %62 = vadd.xlane.f32.xlu0 %v61
  %v63 = vpop.xlane.xlu0 %62
  %v64 = vsel %vm24, %v21, 0.0
  %65 = vadd.xlane.f32.xlu0 %v64
  %v66 = vpop.xlane.xlu0 %65
  %v67 = vsel %vm24, %v22, 0.0
  %68 = vadd.xlane.f32.xlu0 %v67
  %v69 = vpop.xlane.xlu0 %68
  %v70 = vsel %vm24, %v23, 0.0
  %71 = vadd.xlane.f32.xlu0 %v70
  %v72 = vpop.xlane.xlu0 %71
  %v73 = vmul.f32 %v27, 0.0625
  %v74 = vmul.f32 %v30, 0.0625
  %v75 = vmul.f32 %v33, 0.0625
  %v76 = vmul.f32 %v36, 0.0625
  %v77 = vmul.f32 %v39, 0.0625
  %v78 = vmul.f32 %v42, 0.0625
  %v79 = vmul.f32 %v45, 0.0625
  %v80 = vmul.f32 %v48, 0.0625
  %v81 = vmul.f32 %v51, 0.0625
  %v82 = vmul.f32 %v54, 0.0625
  %v83 = vmul.f32 %v57, 0.0625
  %v84 = vmul.f32 %v60, 0.0625
  %v85 = vmul.f32 %v63, 0.0625
  %v86 = vmul.f32 %v66, 0.0625
  %v87 = vmul.f32 %v69, 0.0625
  %v88 = vmul.f32 %v72, 0.0625
  %vm89 = vcmask 7168
  %90 = vst.msk [vmem:[%s1] sm:$0xff] %vm89, %v73
  %91 = vst.msk [vmem:[%s1 + $0x8] sm:$0xff] %vm89, %v74
  %92 = vst.msk [vmem:[%s1 + $0x10] sm:$0xff] %vm89, %v75
  %93 = vst.msk [vmem:[%s1 + $0x18] sm:$0xff] %vm89, %v76
  %94 = vst.msk [vmem:[%s1 + $0x20] sm:$0xff] %vm89, %v77
  %95 = vst.msk [vmem:[%s1 + $0x28] sm:$0xff] %vm89, %v78
  %96 = vst.msk [vmem:[%s1 + $0x30] sm:$0xff] %vm89, %v79
  %97 = vst.msk [vmem:[%s1 + $0x38] sm:$0xff] %vm89, %v80
  %98 = vst.msk [vmem:[%s1 + $0x40] sm:$0xff] %vm89, %v81
  %99 = vst.msk [vmem:[%s1 + $0x48] sm:$0xff] %vm89, %v82
  %100 = vst.msk [vmem:[%s1 + $0x50] sm:$0xff] %vm89, %v83
  %101 = vst.msk [vmem:[%s1 + $0x58] sm:$0xff] %vm89, %v84
  %102 = vst.msk [vmem:[%s1 + $0x60] sm:$0xff] %vm89, %v85
  %103 = vst.msk [vmem:[%s1 + $0x68] sm:$0xff] %vm89, %v86
  %104 = vst.msk [vmem:[%s1 + $0x70] sm:$0xff] %vm89, %v87
  %105 = vst.msk [vmem:[%s1 + $0x78] sm:$0xff] %vm89, %v88
  // Predicated region
  $region6: #{tpu_custom_call.1} parent=0 // pred_check
    _
  $region7: #{tpu_custom_call.1} parent=0 // pred_check_branch
    %107 = sbr.rel (0) target = $region9
  $region8: #{tpu_custom_call.1} parent=0 // pred_region
    _
  $region9: #{tpu_custom_call.1} parent=0 // pred_fallthru
    _
  // Predicated region
  $region10: #{tpu_custom_call.1} parent=0 // pred_check
    _
  $region11: #{tpu_custom_call.1} parent=0 // pred_check_branch
    %109 = sbr.rel (0) target = $region13
  $region12: #{tpu_custom_call.1} parent=0 // pred_region
    _
  $region13: #{tpu_custom_call.1} parent=0 // pred_fallthru
    _

</llo_original>
